<compile_context>
chip_gen: v5e
topology: v5e:2x2
jax: 0.10.0
libtpu: 0.0.40
codegen_flags: <defaults>
</compile_context>

<pallas_src>
import functools

import numpy as np
import jax
import jax.numpy as jnp
from jax.experimental import pallas as pl
from jax.experimental.pallas import tpu as pltpu


def _spectral_norm_scaling(W: np.ndarray, rho_desired: float) -> np.ndarray:
    """Scale W so its spectral radius (max |eigenvalue|) equals rho_desired."""
    e = np.max(np.abs(np.linalg.eigvals(W.astype(np.float64))))
    return (W * (rho_desired / e)).astype(np.float32)


def _liquid_ron_kernel(x_ref, x2h_ref, h2h_ref, w_ro_ref,
                       useq_ref, spkseq_ref, ro_ref, *,
                       T, Bp, H, leak, threshold, reset, bias):
    """Whole LIF reservoir forward in one kernel invocation.

    x_ref     : (T*Bp, n_inp)  time-major flattened, batch padded to sublanes
    x2h_ref   : (n_inp, H)     input-to-hidden weights
    h2h_ref   : (H, H)         hidden-to-hidden (reservoir) weights
    w_ro_ref  : (H, H)         readout weight, PyTorch (out, in) layout
    useq_ref  : (Bp, T*H)      lane-dense packed membrane-potential sequence
    spkseq_ref: (Bp, T*H)      lane-dense packed spike sequence
    ro_ref    : (Bp, H)        readout of the last membrane state
    """
    # Prologue: hoist the input projection out of the recurrence.
    # One (T*Bp, n_inp) @ (n_inp, H) matmul for all frames; bias folded in.
    xin = jnp.dot(x_ref[...], x2h_ref[...],
                  preferred_element_type=jnp.float32) + bias          # (T*Bp, H)

    h2h = h2h_ref[...]
    keep = 1.0 - leak                      # (1 - dt/rc), Python float literal
    u = jnp.zeros((Bp, H), dtype=jnp.float32)

    us = []
    spks = []
    # T is a small static constant -> fully unrolled serial recurrence; the
    # per-step critical path is a single latency-bound (Bp,H)@(H,H) matmul.
    # TODO(synk): a persistent-RHS MXU variant (pltpu.matmul_push_rhs /
    # matmul_acc_lhs / matmul_pop keeping h2h staged across the recurrence)
    # was suggested; kept as jnp.dot here for robust lowering at 32x32 shapes.
    for t in range(T):
        spike = u > threshold                         # PRE-update spike mask
        xin_t = xin[t * Bp:(t + 1) * Bp, :]           # sublane-aligned slice
        pre = jnp.dot(u, h2h, preferred_element_type=jnp.float32) + xin_t
        # u + (dt/rc) * (-u + pre)  ==  (1 - dt/rc) * u + (dt/rc) * pre,
        # then reset where the pre-update membrane potential spiked.
        u = jnp.where(spike, reset, keep * u + leak * pre)
        us.append(u)
        spks.append(spike.astype(jnp.float32))

    # Single full-width (unmasked, lane-dense) stores of the packed slabs.
    useq_ref[...] = jnp.concatenate(us, axis=1)       # (Bp, T*H)
    spkseq_ref[...] = jnp.concatenate(spks, axis=1)   # (Bp, T*H)

    # readout = u_last @ W.T   (nn.Linear(n_hid, n_hid, bias=False)); the
    # transpose is expressed via the contraction dims -> no wrapper transpose.
    ro_ref[...] = jax.lax.dot_general(
        u, w_ro_ref[...],
        dimension_numbers=(((1,), (1,)), ((), ())),
        preferred_element_type=jnp.float32)


def liquid_ron_forward(x, h2h, x2h, w_readout, *,
                       dt, rc, threshold, reset, bias):
    """x: (batch, time, n_inp) float32.
    Returns (readout (B,H), u_seq (B,T,H), spike_seq (B,T,H))."""
    B, T, n_inp = x.shape
    H = h2h.shape[0]
    Bp = ((B + 7) // 8) * 8          # pad batch to a sublane multiple
    leak = float(dt) / float(rc)

    # Time-major flatten with the batch padded to Bp so per-step row blocks
    # are tile-aligned: row index = t*Bp + b.  Pad rows are zero and harmless.
    x_tm = jnp.transpose(x.astype(jnp.float32), (1, 0, 2))            # (T,B,n)
    if Bp != B:
        x_tm = jnp.pad(x_tm, ((0, 0), (0, Bp - B), (0, 0)))
    x_flat = x_tm.reshape(T * Bp, n_inp)

    kernel = functools.partial(
        _liquid_ron_kernel, T=T, Bp=Bp, H=H, leak=leak,
        threshold=float(threshold), reset=float(reset), bias=float(bias))

    vmem = pl.BlockSpec(memory_space=pltpu.MemorySpace.VMEM)
    useq_packed, spk_packed, readout_p = pl.pallas_call(
        kernel,
        out_shape=(
            jax.ShapeDtypeStruct((Bp, T * H), jnp.float32),   # u slab
            jax.ShapeDtypeStruct((Bp, T * H), jnp.float32),   # spike slab
            jax.ShapeDtypeStruct((Bp, H), jnp.float32),       # readout
        ),
        in_specs=[vmem, vmem, vmem, vmem],
        out_specs=(vmem, vmem, vmem),
    )(x_flat, x2h.astype(jnp.float32), h2h.astype(jnp.float32),
      w_readout.astype(jnp.float32))

    u_seq = useq_packed[:B].reshape(B, T, H)        # reshape is layout-free
    spk_seq = spk_packed[:B].reshape(B, T, H)
    return readout_p[:B], u_seq, spk_seq


def _reference_forward(x, h2h, x2h, w_readout, *,
                       dt, rc, threshold, reset, bias):
    """Pure-JAX transcription of the PyTorch forward (functional semantics)."""
    B, T, _ = x.shape
    H = h2h.shape[0]
    a = dt / rc
    u = jnp.zeros((B, H), jnp.float32)
    us, spks = [], []
    for t in range(T):
        spike = (u > threshold).astype(jnp.float32)
        u_dot = -u + (u @ h2h + x[:, t] @ x2h + bias)
        u = u + a * u_dot
        u = jnp.where(spike == 1.0, reset, u)
        us.append(u)
        spks.append(spike)
    u_seq = jnp.stack(us, axis=1)
    spk_seq = jnp.stack(spks, axis=1)
    readout = u_seq[:, -1] @ w_readout.T
    return readout, u_seq, spk_seq


if __name__ == "__main__":
    # Model hyperparameters (small, consistent with the module's __init__)
    n_inp, n_hid = 4, 32
    Ne, Ni = 24, 8                       # Ne + Ni == n_hid
    batch, T = 2, 8
    dt, rc = 0.1, 5.0
    threshold, reset, bias = 1.0, 0.0, 0.1
    rho = 0.9
    w_e, w_i = 0.5, 0.2
    win_e, win_i = 1.0, 1.0

    key = jax.random.PRNGKey(0)
    k_he, k_hi, k_x2h, k_ro, k_x = jax.random.split(key, 5)

    # h2h = concat(w_e * U(0,1)[H,Ne], -w_i * U(0,1)[H,Ni]), spectral-radius scaled
    h2h_e = w_e * jax.random.uniform(k_he, (Ne + Ni, Ne), dtype=jnp.float32)
    h2h_i = -w_i * jax.random.uniform(k_hi, (Ne + Ni, Ni), dtype=jnp.float32)
    h2h_np = np.asarray(jnp.concatenate([h2h_e, h2h_i], axis=1), dtype=np.float32)
    h2h = jnp.asarray(_spectral_norm_scaling(h2h_np, rho))

    # x2h = U(0,1)[n_inp, n_hid] * input_scaling (per-column)
    input_scaling = np.concatenate(
        (win_e * np.ones(Ne), win_i * np.ones(Ni))).astype(np.float32)
    x2h = (jax.random.uniform(k_x2h, (n_inp, n_hid), dtype=jnp.float32)
           * jnp.asarray(input_scaling))

    # readout nn.Linear(n_hid, n_hid, bias=False) weight (out, in)
    bound = 1.0 / np.sqrt(n_hid)
    w_readout = jax.random.uniform(k_ro, (n_hid, n_hid), dtype=jnp.float32,
                                   minval=-bound, maxval=bound)

    # Input time-series (batch, time, n_inp)
    x = jax.random.normal(k_x, (batch, T, n_inp), dtype=jnp.float32)

    # Jit a closure so the tiny wrapper pre/post ops fuse around the one
    # pallas_call (hyperparameters stay Python floats, not tracers).
    fwd = jax.jit(lambda x_, h2h_, x2h_, wro_: liquid_ron_forward(
        x_, h2h_, x2h_, wro_,
        dt=dt, rc=rc, threshold=threshold, reset=reset, bias=bias))

    readout, u_seq, spk_seq = fwd(x, h2h, x2h, w_readout)
    jax.block_until_ready((readout, u_seq, spk_seq))

    assert readout.shape == (batch, n_hid)
    assert u_seq.shape == (batch, T, n_hid)
    assert spk_seq.shape == (batch, T, n_hid)

    # Correctness check against a pure-JAX transcription of the PyTorch forward.
    ro_ref, u_ref, spk_ref = _reference_forward(
        x, h2h, x2h, w_readout,
        dt=dt, rc=rc, threshold=threshold, reset=reset, bias=bias)
    np.testing.assert_allclose(np.asarray(u_seq), np.asarray(u_ref),
                               rtol=2e-4, atol=2e-5)
    np.testing.assert_allclose(np.asarray(spk_seq), np.asarray(spk_ref),
                               rtol=0, atol=0)
    np.testing.assert_allclose(np.asarray(readout), np.asarray(ro_ref),
                               rtol=2e-4, atol=2e-5)

    print("KERNEL_OK")
</pallas_src>

<mosaic_0001>
module attributes {stable_mosaic.version = 11 : i64} {
  func.func @_liquid_ron_kernel(%arg0: memref<64x4xf32, #tpu.memory_space<vmem>>, %arg1: memref<4x32xf32, #tpu.memory_space<vmem>>, %arg2: memref<32x32xf32, #tpu.memory_space<vmem>>, %arg3: memref<32x32xf32, #tpu.memory_space<vmem>>, %arg4: memref<8x256xf32, #tpu.memory_space<vmem>>, %arg5: memref<8x256xf32, #tpu.memory_space<vmem>>, %arg6: memref<8x32xf32, #tpu.memory_space<vmem>>) attributes {dimension_semantics = [], scalar_prefetch = 0 : i64, scratch_operands = 0 : i64, tpu.core_type = #tpu.core_type<tc>} {
    %c0 = arith.constant 0 : index
    %c0_0 = arith.constant 0 : index
    %0 = vector.load %arg0[%c0, %c0_0] : memref<64x4xf32, #tpu.memory_space<vmem>>, vector<64x4xf32>
    %c0_1 = arith.constant 0 : index
    %c0_2 = arith.constant 0 : index
    %1 = vector.load %arg1[%c0_1, %c0_2] : memref<4x32xf32, #tpu.memory_space<vmem>>, vector<4x32xf32>
    %cst = arith.constant dense<0.000000e+00> : vector<64x32xf32>
    %2 = tpu.matmul %0, %1, %cst {dimension_numbers = #tpu.dot_dimension_numbers<[1], [0], [0], [1], [0, 0, 1, 1], [], []>} : vector<64x4xf32>, vector<4x32xf32>, vector<64x32xf32> -> vector<64x32xf32>
    %cst_3 = arith.constant 1.000000e-01 : f32
    %3 = vector.broadcast %cst_3 : f32 to vector<64x32xf32>
    %4 = arith.addf %2, %3 : vector<64x32xf32>
    %c0_4 = arith.constant 0 : index
    %c0_5 = arith.constant 0 : index
    %5 = vector.load %arg2[%c0_4, %c0_5] : memref<32x32xf32, #tpu.memory_space<vmem>>, vector<32x32xf32>
    %cst_6 = arith.constant 0.000000e+00 : f32
    %6 = vector.broadcast %cst_6 : f32 to vector<8x32xf32>
    %cst_7 = arith.constant 1.000000e+00 : f32
    %7 = vector.broadcast %cst_7 : f32 to vector<8x32xf32>
    %8 = arith.cmpf ogt, %6, %7 : vector<8x32xf32>
    %9 = vector.extract_strided_slice %4 {offsets = [0, 0], sizes = [8, 32], strides = [1, 1]} : vector<64x32xf32> to vector<8x32xf32>
    %cst_8 = arith.constant dense<0.000000e+00> : vector<8x32xf32>
    %10 = tpu.matmul %6, %5, %cst_8 {dimension_numbers = #tpu.dot_dimension_numbers<[1], [0], [0], [1], [0, 0, 1, 1], [], []>} : vector<8x32xf32>, vector<32x32xf32>, vector<8x32xf32> -> vector<8x32xf32>
    %11 = arith.addf %10, %9 : vector<8x32xf32>
    %cst_9 = arith.constant 9.800000e-01 : f32
    %12 = vector.broadcast %cst_9 : f32 to vector<8x32xf32>
    %13 = arith.mulf %12, %6 : vector<8x32xf32>
    %cst_10 = arith.constant 2.000000e-02 : f32
    %14 = vector.broadcast %cst_10 : f32 to vector<8x32xf32>
    %15 = arith.mulf %14, %11 : vector<8x32xf32>
    %16 = arith.addf %13, %15 : vector<8x32xf32>
    %cst_11 = arith.constant 0.000000e+00 : f32
    %17 = vector.broadcast %cst_11 : f32 to vector<8x32xf32>
    %18 = arith.select %8, %17, %16 : vector<8x32xi1>, vector<8x32xf32>
    %19 = arith.extui %8 : vector<8x32xi1> to vector<8x32xi32>
    %20 = arith.sitofp %19 : vector<8x32xi32> to vector<8x32xf32>
    %cst_12 = arith.constant 1.000000e+00 : f32
    %21 = vector.broadcast %cst_12 : f32 to vector<8x32xf32>
    %22 = arith.cmpf ogt, %18, %21 : vector<8x32xf32>
    %23 = vector.extract_strided_slice %4 {offsets = [8, 0], sizes = [8, 32], strides = [1, 1]} : vector<64x32xf32> to vector<8x32xf32>
    %cst_13 = arith.constant dense<0.000000e+00> : vector<8x32xf32>
    %24 = tpu.matmul %18, %5, %cst_13 {dimension_numbers = #tpu.dot_dimension_numbers<[1], [0], [0], [1], [0, 0, 1, 1], [], []>} : vector<8x32xf32>, vector<32x32xf32>, vector<8x32xf32> -> vector<8x32xf32>
    %25 = arith.addf %24, %23 : vector<8x32xf32>
    %cst_14 = arith.constant 9.800000e-01 : f32
    %26 = vector.broadcast %cst_14 : f32 to vector<8x32xf32>
    %27 = arith.mulf %26, %18 : vector<8x32xf32>
    %cst_15 = arith.constant 2.000000e-02 : f32
    %28 = vector.broadcast %cst_15 : f32 to vector<8x32xf32>
    %29 = arith.mulf %28, %25 : vector<8x32xf32>
    %30 = arith.addf %27, %29 : vector<8x32xf32>
    %cst_16 = arith.constant 0.000000e+00 : f32
    %31 = vector.broadcast %cst_16 : f32 to vector<8x32xf32>
    %32 = arith.select %22, %31, %30 : vector<8x32xi1>, vector<8x32xf32>
    %33 = arith.extui %22 : vector<8x32xi1> to vector<8x32xi32>
    %34 = arith.sitofp %33 : vector<8x32xi32> to vector<8x32xf32>
    %cst_17 = arith.constant 1.000000e+00 : f32
    %35 = vector.broadcast %cst_17 : f32 to vector<8x32xf32>
    %36 = arith.cmpf ogt, %32, %35 : vector<8x32xf32>
    %37 = vector.extract_strided_slice %4 {offsets = [16, 0], sizes = [8, 32], strides = [1, 1]} : vector<64x32xf32> to vector<8x32xf32>
    %cst_18 = arith.constant dense<0.000000e+00> : vector<8x32xf32>
    %38 = tpu.matmul %32, %5, %cst_18 {dimension_numbers = #tpu.dot_dimension_numbers<[1], [0], [0], [1], [0, 0, 1, 1], [], []>} : vector<8x32xf32>, vector<32x32xf32>, vector<8x32xf32> -> vector<8x32xf32>
    %39 = arith.addf %38, %37 : vector<8x32xf32>
    %cst_19 = arith.constant 9.800000e-01 : f32
    %40 = vector.broadcast %cst_19 : f32 to vector<8x32xf32>
    %41 = arith.mulf %40, %32 : vector<8x32xf32>
    %cst_20 = arith.constant 2.000000e-02 : f32
    %42 = vector.broadcast %cst_20 : f32 to vector<8x32xf32>
    %43 = arith.mulf %42, %39 : vector<8x32xf32>
    %44 = arith.addf %41, %43 : vector<8x32xf32>
    %cst_21 = arith.constant 0.000000e+00 : f32
    %45 = vector.broadcast %cst_21 : f32 to vector<8x32xf32>
    %46 = arith.select %36, %45, %44 : vector<8x32xi1>, vector<8x32xf32>
    %47 = arith.extui %36 : vector<8x32xi1> to vector<8x32xi32>
    %48 = arith.sitofp %47 : vector<8x32xi32> to vector<8x32xf32>
    %cst_22 = arith.constant 1.000000e+00 : f32
    %49 = vector.broadcast %cst_22 : f32 to vector<8x32xf32>
    %50 = arith.cmpf ogt, %46, %49 : vector<8x32xf32>
    %51 = vector.extract_strided_slice %4 {offsets = [24, 0], sizes = [8, 32], strides = [1, 1]} : vector<64x32xf32> to vector<8x32xf32>
    %cst_23 = arith.constant dense<0.000000e+00> : vector<8x32xf32>
    %52 = tpu.matmul %46, %5, %cst_23 {dimension_numbers = #tpu.dot_dimension_numbers<[1], [0], [0], [1], [0, 0, 1, 1], [], []>} : vector<8x32xf32>, vector<32x32xf32>, vector<8x32xf32> -> vector<8x32xf32>
    %53 = arith.addf %52, %51 : vector<8x32xf32>
    %cst_24 = arith.constant 9.800000e-01 : f32
    %54 = vector.broadcast %cst_24 : f32 to vector<8x32xf32>
    %55 = arith.mulf %54, %46 : vector<8x32xf32>
    %cst_25 = arith.constant 2.000000e-02 : f32
    %56 = vector.broadcast %cst_25 : f32 to vector<8x32xf32>
    %57 = arith.mulf %56, %53 : vector<8x32xf32>
    %58 = arith.addf %55, %57 : vector<8x32xf32>
    %cst_26 = arith.constant 0.000000e+00 : f32
    %59 = vector.broadcast %cst_26 : f32 to vector<8x32xf32>
    %60 = arith.select %50, %59, %58 : vector<8x32xi1>, vector<8x32xf32>
    %61 = arith.extui %50 : vector<8x32xi1> to vector<8x32xi32>
    %62 = arith.sitofp %61 : vector<8x32xi32> to vector<8x32xf32>
    %cst_27 = arith.constant 1.000000e+00 : f32
    %63 = vector.broadcast %cst_27 : f32 to vector<8x32xf32>
    %64 = arith.cmpf ogt, %60, %63 : vector<8x32xf32>
    %65 = vector.extract_strided_slice %4 {offsets = [32, 0], sizes = [8, 32], strides = [1, 1]} : vector<64x32xf32> to vector<8x32xf32>
    %cst_28 = arith.constant dense<0.000000e+00> : vector<8x32xf32>
    %66 = tpu.matmul %60, %5, %cst_28 {dimension_numbers = #tpu.dot_dimension_numbers<[1], [0], [0], [1], [0, 0, 1, 1], [], []>} : vector<8x32xf32>, vector<32x32xf32>, vector<8x32xf32> -> vector<8x32xf32>
    %67 = arith.addf %66, %65 : vector<8x32xf32>
    %cst_29 = arith.constant 9.800000e-01 : f32
    %68 = vector.broadcast %cst_29 : f32 to vector<8x32xf32>
    %69 = arith.mulf %68, %60 : vector<8x32xf32>
    %cst_30 = arith.constant 2.000000e-02 : f32
    %70 = vector.broadcast %cst_30 : f32 to vector<8x32xf32>
    %71 = arith.mulf %70, %67 : vector<8x32xf32>
    %72 = arith.addf %69, %71 : vector<8x32xf32>
    %cst_31 = arith.constant 0.000000e+00 : f32
    %73 = vector.broadcast %cst_31 : f32 to vector<8x32xf32>
    %74 = arith.select %64, %73, %72 : vector<8x32xi1>, vector<8x32xf32>
    %75 = arith.extui %64 : vector<8x32xi1> to vector<8x32xi32>
    %76 = arith.sitofp %75 : vector<8x32xi32> to vector<8x32xf32>
    %cst_32 = arith.constant 1.000000e+00 : f32
    %77 = vector.broadcast %cst_32 : f32 to vector<8x32xf32>
    %78 = arith.cmpf ogt, %74, %77 : vector<8x32xf32>
    %79 = vector.extract_strided_slice %4 {offsets = [40, 0], sizes = [8, 32], strides = [1, 1]} : vector<64x32xf32> to vector<8x32xf32>
    %cst_33 = arith.constant dense<0.000000e+00> : vector<8x32xf32>
    %80 = tpu.matmul %74, %5, %cst_33 {dimension_numbers = #tpu.dot_dimension_numbers<[1], [0], [0], [1], [0, 0, 1, 1], [], []>} : vector<8x32xf32>, vector<32x32xf32>, vector<8x32xf32> -> vector<8x32xf32>
    %81 = arith.addf %80, %79 : vector<8x32xf32>
    %cst_34 = arith.constant 9.800000e-01 : f32
    %82 = vector.broadcast %cst_34 : f32 to vector<8x32xf32>
    %83 = arith.mulf %82, %74 : vector<8x32xf32>
    %cst_35 = arith.constant 2.000000e-02 : f32
    %84 = vector.broadcast %cst_35 : f32 to vector<8x32xf32>
    %85 = arith.mulf %84, %81 : vector<8x32xf32>
    %86 = arith.addf %83, %85 : vector<8x32xf32>
    %cst_36 = arith.constant 0.000000e+00 : f32
    %87 = vector.broadcast %cst_36 : f32 to vector<8x32xf32>
    %88 = arith.select %78, %87, %86 : vector<8x32xi1>, vector<8x32xf32>
    %89 = arith.extui %78 : vector<8x32xi1> to vector<8x32xi32>
    %90 = arith.sitofp %89 : vector<8x32xi32> to vector<8x32xf32>
    %cst_37 = arith.constant 1.000000e+00 : f32
    %91 = vector.broadcast %cst_37 : f32 to vector<8x32xf32>
    %92 = arith.cmpf ogt, %88, %91 : vector<8x32xf32>
    %93 = vector.extract_strided_slice %4 {offsets = [48, 0], sizes = [8, 32], strides = [1, 1]} : vector<64x32xf32> to vector<8x32xf32>
    %cst_38 = arith.constant dense<0.000000e+00> : vector<8x32xf32>
    %94 = tpu.matmul %88, %5, %cst_38 {dimension_numbers = #tpu.dot_dimension_numbers<[1], [0], [0], [1], [0, 0, 1, 1], [], []>} : vector<8x32xf32>, vector<32x32xf32>, vector<8x32xf32> -> vector<8x32xf32>
    %95 = arith.addf %94, %93 : vector<8x32xf32>
    %cst_39 = arith.constant 9.800000e-01 : f32
    %96 = vector.broadcast %cst_39 : f32 to vector<8x32xf32>
    %97 = arith.mulf %96, %88 : vector<8x32xf32>
    %cst_40 = arith.constant 2.000000e-02 : f32
    %98 = vector.broadcast %cst_40 : f32 to vector<8x32xf32>
    %99 = arith.mulf %98, %95 : vector<8x32xf32>
    %100 = arith.addf %97, %99 : vector<8x32xf32>
    %cst_41 = arith.constant 0.000000e+00 : f32
    %101 = vector.broadcast %cst_41 : f32 to vector<8x32xf32>
    %102 = arith.select %92, %101, %100 : vector<8x32xi1>, vector<8x32xf32>
    %103 = arith.extui %92 : vector<8x32xi1> to vector<8x32xi32>
    %104 = arith.sitofp %103 : vector<8x32xi32> to vector<8x32xf32>
    %cst_42 = arith.constant 1.000000e+00 : f32
    %105 = vector.broadcast %cst_42 : f32 to vector<8x32xf32>
    %106 = arith.cmpf ogt, %102, %105 : vector<8x32xf32>
    %107 = vector.extract_strided_slice %4 {offsets = [56, 0], sizes = [8, 32], strides = [1, 1]} : vector<64x32xf32> to vector<8x32xf32>
    %cst_43 = arith.constant dense<0.000000e+00> : vector<8x32xf32>
    %108 = tpu.matmul %102, %5, %cst_43 {dimension_numbers = #tpu.dot_dimension_numbers<[1], [0], [0], [1], [0, 0, 1, 1], [], []>} : vector<8x32xf32>, vector<32x32xf32>, vector<8x32xf32> -> vector<8x32xf32>
    %109 = arith.addf %108, %107 : vector<8x32xf32>
    %cst_44 = arith.constant 9.800000e-01 : f32
    %110 = vector.broadcast %cst_44 : f32 to vector<8x32xf32>
    %111 = arith.mulf %110, %102 : vector<8x32xf32>
    %cst_45 = arith.constant 2.000000e-02 : f32
    %112 = vector.broadcast %cst_45 : f32 to vector<8x32xf32>
    %113 = arith.mulf %112, %109 : vector<8x32xf32>
    %114 = arith.addf %111, %113 : vector<8x32xf32>
    %cst_46 = arith.constant 0.000000e+00 : f32
    %115 = vector.broadcast %cst_46 : f32 to vector<8x32xf32>
    %116 = arith.select %106, %115, %114 : vector<8x32xi1>, vector<8x32xf32>
    %117 = arith.extui %106 : vector<8x32xi1> to vector<8x32xi32>
    %118 = arith.sitofp %117 : vector<8x32xi32> to vector<8x32xf32>
    %119 = tpu.concatenate %18, %32, %46, %60, %74, %88, %102, %116 in 1 : vector<8x32xf32>, vector<8x32xf32>, vector<8x32xf32>, vector<8x32xf32>, vector<8x32xf32>, vector<8x32xf32>, vector<8x32xf32>, vector<8x32xf32> -> vector<8x256xf32>
    %c0_47 = arith.constant 0 : index
    %c0_48 = arith.constant 0 : index
    %120 = vector.load %arg4[%c0_47, %c0_48] : memref<8x256xf32, #tpu.memory_space<vmem>>, vector<8x256xf32>
    tpu.vector_store %arg4[%c0_47, %c0_48], %119 {strides = array<i32>} : memref<8x256xf32, #tpu.memory_space<vmem>>, vector<8x256xf32>,
    %121 = tpu.concatenate %20, %34, %48, %62, %76, %90, %104, %118 in 1 : vector<8x32xf32>, vector<8x32xf32>, vector<8x32xf32>, vector<8x32xf32>, vector<8x32xf32>, vector<8x32xf32>, vector<8x32xf32>, vector<8x32xf32> -> vector<8x256xf32>
    %c0_49 = arith.constant 0 : index
    %c0_50 = arith.constant 0 : index
    %122 = vector.load %arg5[%c0_49, %c0_50] : memref<8x256xf32, #tpu.memory_space<vmem>>, vector<8x256xf32>
    tpu.vector_store %arg5[%c0_49, %c0_50], %121 {strides = array<i32>} : memref<8x256xf32, #tpu.memory_space<vmem>>, vector<8x256xf32>,
    %c0_51 = arith.constant 0 : index
    %c0_52 = arith.constant 0 : index
    %123 = vector.load %arg3[%c0_51, %c0_52] : memref<32x32xf32, #tpu.memory_space<vmem>>, vector<32x32xf32>
    %cst_53 = arith.constant dense<0.000000e+00> : vector<8x32xf32>
    %124 = tpu.matmul %116, %123, %cst_53 {dimension_numbers = #tpu.dot_dimension_numbers<[1], [1], [0], [0], [0, 0, 1, 0], [], []>} : vector<8x32xf32>, vector<32x32xf32>, vector<8x32xf32> -> vector<8x32xf32>
    %c0_54 = arith.constant 0 : index
    %c0_55 = arith.constant 0 : index
    %125 = vector.load %arg6[%c0_54, %c0_55] : memref<8x32xf32, #tpu.memory_space<vmem>>, vector<8x32xf32>
    tpu.vector_store %arg6[%c0_54, %c0_55], %124 {strides = array<i32>} : memref<8x32xf32, #tpu.memory_space<vmem>>, vector<8x32xf32>,
    return
  }
}

</mosaic_0001>

<llo_original>
// kernel: _lambda_.1
$region0: #{_lambda_.1}
  #allocation0 [shape = 'u32[]', space=smem, size = 0x4, offset = 0x4, fixed_abs, tag = 'smem constant byte address 0x4 - core index']
  #allocation1 [shape = 'u32[72,128]{1,0:T(1,128)}', space=vmem, size = 0x9000, scoped, tag = 'internal scratch']
  %s0 = inlined_call_operand.vmem [shape: f32[64,4], index: 0, kind: input, shape index: {}]
  %s1 = inlined_call_operand.vmem [shape: f32[4,32], index: 1, kind: input, shape index: {}]
  %s2 = inlined_call_operand.vmem [shape: f32[32,32], index: 2, kind: input, shape index: {}]
  %s3 = inlined_call_operand.vmem [shape: f32[32,32], index: 3, kind: input, shape index: {}]
  %s4 = inlined_call_operand.vmem [shape: f32[8,256], index: 4, kind: output, shape index: {0}]
  %s5 = inlined_call_operand.vmem [shape: f32[8,256], index: 5, kind: output, shape index: {1}]
  %s6 = inlined_call_operand.vmem [shape: f32[8,32], index: 6, kind: output, shape index: {2}]
  %7 = xla_tuple %s4, %s5, %s6
  %s8 = sld [smem:[#allocation0]]
  $region42: #{_lambda_.1} parent=0
    _
  %s10 = ssub.s32 1, %s8
  %s11 = scalar_select 0, %s10, %s8
  // Predicated region
  $region2: #{_lambda_.1} parent=0 // pred_check
    _
  $region3: #{_lambda_.1} parent=0 // pred_check_branch
    %13 = sbr.rel (0) target = $region5
  $region4: #{_lambda_.1} parent=0 // pred_region
    _
  $region5: #{_lambda_.1} parent=0 // pred_fallthru
    _
  // Predicated region
  $region6: #{_lambda_.1} parent=0 // pred_check
    _
  $region7: #{_lambda_.1} parent=0 // pred_check_branch
    %15 = sbr.rel (0) target = $region9
  $region8: #{_lambda_.1} parent=0 // pred_region
    _
  $region9: #{_lambda_.1} parent=0 // pred_fallthru
    _
  // Predicated region
  $region10: #{_lambda_.1} parent=0 // pred_check
    _
  $region11: #{_lambda_.1} parent=0 // pred_check_branch
    %17 = sbr.rel (0) target = $region13
  $region12: #{_lambda_.1} parent=0 // pred_region
    _
  $region13: #{_lambda_.1} parent=0 // pred_fallthru
    _
  // Predicated region
  $region14: #{_lambda_.1} parent=0 // pred_check
    _
  $region15: #{_lambda_.1} parent=0 // pred_check_branch
    %19 = sbr.rel (0) target = $region17
  $region16: #{_lambda_.1} parent=0 // pred_region
    _
  $region17: #{_lambda_.1} parent=0 // pred_fallthru
    _
  %v20 = vld [vmem:[%s0] sm:$0xff]
  %v21 = vld [vmem:[%s0 + $0x8] sm:$0xff]
  %v22 = vld [vmem:[%s0 + $0x10] sm:$0xff]
  %v23 = vld [vmem:[%s0 + $0x18] sm:$0xff]
  %v24 = vld [vmem:[%s0 + $0x20] sm:$0xff]
  %v25 = vld [vmem:[%s0 + $0x28] sm:$0xff]
  %v26 = vld [vmem:[%s0 + $0x30] sm:$0xff]
  %v27 = vld [vmem:[%s0 + $0x38] sm:$0xff]
  %v28 = vld [vmem:[%s1] sm:$0xf]
  %vm29 = vcmask 31744
  %v31 = vsel %vm29, %v20, 0
  %v34 = vsel %vm29, %v21, 0
  %v37 = vsel %vm29, %v22, 0
  %v40 = vsel %vm29, %v23, 0
  %v43 = vsel %vm29, %v24, 0
  %v46 = vsel %vm29, %v25, 0
  %v49 = vsel %vm29, %v26, 0
  %v52 = vsel %vm29, %v27, 0
  %vm54 = vcmask 1043456
  %v56 = vsel %vm54, %v28, 0
  %58 = vmatpush.msra.mxu0 0.0
  %59 = vmatpush.msra.mxu0 0.0
  %60 = vmatpush.msra.mxu0 0.0
  %61 = vmatpush.msra.mxu0 0.0
  %62 = vmatpush.msra.mxu0 0.0
  %63 = vmatpush.msra.mxu0 0.0
  %64 = vmatpush.msra.mxu0 0.0
  %65 = vmatpush.msra.mxu0 0.0
  %66 = vmatpush.msra.mxu0 0.0
  %67 = vmatpush.msra.mxu0 0.0
  %68 = vmatpush.msra.mxu0 0.0
  %69 = vmatpush.msra.mxu0 0.0
  %70 = vmatpush.msra.mxu0 0.0
  %71 = vmatpush.msra.mxu0 0.0
  %72 = vmatpush.msra.mxu0 0.0
  %73 = vmatpush.msra.mxu0 %v56
  %74 = vmatmul.f32.gmra.mxu0 %v31
  %v75 = vpop.f32.mrf.mxu0
  %v76 = vadd.f32 0.1, %v75
  %77 = vmatmul.f32.gmra.mxu0 %v34
  %v78 = vpop.f32.mrf.mxu0
  %v79 = vadd.f32 0.1, %v78
  %80 = vmatmul.f32.gmra.mxu0 %v37
  %v81 = vpop.f32.mrf.mxu0
  %v82 = vadd.f32 0.1, %v81
  %83 = vmatmul.f32.gmra.mxu0 %v40
  %v84 = vpop.f32.mrf.mxu0
  %v85 = vadd.f32 0.1, %v84
  %86 = vmatmul.f32.gmra.mxu0 %v43
  %v87 = vpop.f32.mrf.mxu0
  %v88 = vadd.f32 0.1, %v87
  %89 = vmatmul.f32.gmra.mxu0 %v46
  %v90 = vpop.f32.mrf.mxu0
  %v91 = vadd.f32 0.1, %v90
  %92 = vmatmul.f32.gmra.mxu0 %v49
  %v93 = vpop.f32.mrf.mxu0
  %v94 = vadd.f32 0.1, %v93
  %95 = vmatmul.f32.gmra.mxu0 %v52
  %v96 = vpop.f32.mrf.mxu0
  %v97 = vadd.f32 0.1, %v96
  %98 = vdwg.mxu0
  %v99 = vld [vmem:[%s2] sm:$0xff]
  %v100 = vld [vmem:[%s2 + $0x8] sm:$0xff]
  %v101 = vld [vmem:[%s2 + $0x10] sm:$0xff]
  %v102 = vld [vmem:[%s2 + $0x18] sm:$0xff]
  %vm103 = vcmp.gt.f32.partialorder 0.0, 1.0
  %vm104 = vcmask 261120
  %v106 = vsel %vm104, 0.0, 0
  %108 = vmatpush.msra.mxu0 0.0
  %109 = vmatpush.msra.mxu0 0.0
  %110 = vmatpush.msra.mxu0 0.0
  %111 = vmatpush.msra.mxu0 0.0
  %112 = vmatpush.msra.mxu0 0.0
  %113 = vmatpush.msra.mxu0 0.0
  %114 = vmatpush.msra.mxu0 0.0
  %115 = vmatpush.msra.mxu0 0.0
  %116 = vmatpush.msra.mxu0 0.0
  %117 = vmatpush.msra.mxu0 0.0
  %118 = vmatpush.msra.mxu0 0.0
  %119 = vmatpush.msra.mxu0 0.0
  %120 = vmatpush.msra.mxu0 %v102
  %121 = vmatpush.msra.mxu0 %v101
  %122 = vmatpush.msra.mxu0 %v100
  %123 = vmatpush.msra.mxu0 %v99
  %124 = vmatmul.f32.gmra.mxu0 %v106
  %v125 = vpop.f32.mrf.mxu0
  %v126 = vadd.f32 %v76, %v125
  %127 = vdwg.mxu0
  %v128 = vmul.f32 %v126, 0.02
  %v129 = vadd.f32 %v128, 0.0
  %v130 = vsel %vm103, 0.0, %v129
  %v131 = vsel %vm103, 1, 0
  %v132 = vcvt.s32.f32 %v131
  %vm133 = vcmp.gt.f32.partialorder %v130, 1.0
  %v135 = vsel %vm104, %v130, 0
  %137 = vmatpush.msra.mxu0 0.0
  %138 = vmatpush.msra.mxu0 0.0
  %139 = vmatpush.msra.mxu0 0.0
  %140 = vmatpush.msra.mxu0 0.0
  %141 = vmatpush.msra.mxu0 0.0
  %142 = vmatpush.msra.mxu0 0.0
  %143 = vmatpush.msra.mxu0 0.0
  %144 = vmatpush.msra.mxu0 0.0
  %145 = vmatpush.msra.mxu0 0.0
  %146 = vmatpush.msra.mxu0 0.0
  %147 = vmatpush.msra.mxu0 0.0
  %148 = vmatpush.msra.mxu0 0.0
  %149 = vmatpush.msra.mxu0 %v102
  %150 = vmatpush.msra.mxu0 %v101
  %151 = vmatpush.msra.mxu0 %v100
  %152 = vmatpush.msra.mxu0 %v99
  %153 = vmatmul.f32.gmra.mxu0 %v135
  %v154 = vpop.f32.mrf.mxu0
  %v155 = vadd.f32 %v79, %v154
  %156 = vdwg.mxu0
  %v157 = vmul.f32 %v130, 0.98
  %v158 = vmul.f32 %v155, 0.02
  %v159 = vadd.f32 %v157, %v158
  %v160 = vsel %vm133, 0.0, %v159
  %v161 = vsel %vm133, 1, 0
  %v162 = vcvt.s32.f32 %v161
  %vm163 = vcmp.gt.f32.partialorder %v160, 1.0
  %v165 = vsel %vm104, %v160, 0
  %167 = vmatpush.msra.mxu0 0.0
  %168 = vmatpush.msra.mxu0 0.0
  %169 = vmatpush.msra.mxu0 0.0
  %170 = vmatpush.msra.mxu0 0.0
  %171 = vmatpush.msra.mxu0 0.0
  %172 = vmatpush.msra.mxu0 0.0
  %173 = vmatpush.msra.mxu0 0.0
  %174 = vmatpush.msra.mxu0 0.0
  %175 = vmatpush.msra.mxu0 0.0
  %176 = vmatpush.msra.mxu0 0.0
  %177 = vmatpush.msra.mxu0 0.0
  %178 = vmatpush.msra.mxu0 0.0
  %179 = vmatpush.msra.mxu0 %v102
  %180 = vmatpush.msra.mxu0 %v101
  %181 = vmatpush.msra.mxu0 %v100
  %182 = vmatpush.msra.mxu0 %v99
  %183 = vmatmul.f32.gmra.mxu0 %v165
  %v184 = vpop.f32.mrf.mxu0
  %v185 = vadd.f32 %v82, %v184
  %186 = vdwg.mxu0
  %v187 = vmul.f32 %v160, 0.98
  %v188 = vmul.f32 %v185, 0.02
  %v189 = vadd.f32 %v187, %v188
  %v190 = vsel %vm163, 0.0, %v189
  %v191 = vsel %vm163, 1, 0
  %v192 = vcvt.s32.f32 %v191
  %vm193 = vcmp.gt.f32.partialorder %v190, 1.0
  %v195 = vsel %vm104, %v190, 0
  %197 = vmatpush.msra.mxu0 0.0
  %198 = vmatpush.msra.mxu0 0.0
  %199 = vmatpush.msra.mxu0 0.0
  %200 = vmatpush.msra.mxu0 0.0
  %201 = vmatpush.msra.mxu0 0.0
  %202 = vmatpush.msra.mxu0 0.0
  %203 = vmatpush.msra.mxu0 0.0
  %204 = vmatpush.msra.mxu0 0.0
  %205 = vmatpush.msra.mxu0 0.0
  %206 = vmatpush.msra.mxu0 0.0
  %207 = vmatpush.msra.mxu0 0.0
  %208 = vmatpush.msra.mxu0 0.0
  %209 = vmatpush.msra.mxu0 %v102
  %210 = vmatpush.msra.mxu0 %v101
  %211 = vmatpush.msra.mxu0 %v100
  %212 = vmatpush.msra.mxu0 %v99
  %213 = vmatmul.f32.gmra.mxu0 %v195
  %v214 = vpop.f32.mrf.mxu0
  %v215 = vadd.f32 %v85, %v214
  %216 = vdwg.mxu0
  %v217 = vmul.f32 %v190, 0.98
  %v218 = vmul.f32 %v215, 0.02
  %v219 = vadd.f32 %v217, %v218
  %v220 = vsel %vm193, 0.0, %v219
  %v221 = vsel %vm193, 1, 0
  %v222 = vcvt.s32.f32 %v221
  %vm223 = vcmp.gt.f32.partialorder %v220, 1.0
  %v225 = vsel %vm104, %v220, 0
  %227 = vmatpush.msra.mxu0 0.0
  %228 = vmatpush.msra.mxu0 0.0
  %229 = vmatpush.msra.mxu0 0.0
  %230 = vmatpush.msra.mxu0 0.0
  %231 = vmatpush.msra.mxu0 0.0
  %232 = vmatpush.msra.mxu0 0.0
  %233 = vmatpush.msra.mxu0 0.0
  %234 = vmatpush.msra.mxu0 0.0
  %235 = vmatpush.msra.mxu0 0.0
  %236 = vmatpush.msra.mxu0 0.0
  %237 = vmatpush.msra.mxu0 0.0
  %238 = vmatpush.msra.mxu0 0.0
  %239 = vmatpush.msra.mxu0 %v102
  %240 = vmatpush.msra.mxu0 %v101
  %241 = vmatpush.msra.mxu0 %v100
  %242 = vmatpush.msra.mxu0 %v99
  %243 = vmatmul.f32.gmra.mxu0 %v225
  %v244 = vpop.f32.mrf.mxu0
  %v245 = vadd.f32 %v88, %v244
  %246 = vdwg.mxu0
  %v247 = vmul.f32 %v220, 0.98
  %v248 = vmul.f32 %v245, 0.02
  %v249 = vadd.f32 %v247, %v248
  %v250 = vsel %vm223, 0.0, %v249
  %v251 = vsel %vm223, 1, 0
  %v252 = vcvt.s32.f32 %v251
  %vm253 = vcmp.gt.f32.partialorder %v250, 1.0
  %v255 = vsel %vm104, %v250, 0
  %257 = vmatpush.msra.mxu0 0.0
  %258 = vmatpush.msra.mxu0 0.0
  %259 = vmatpush.msra.mxu0 0.0
  %260 = vmatpush.msra.mxu0 0.0
  %261 = vmatpush.msra.mxu0 0.0
  %262 = vmatpush.msra.mxu0 0.0
  %263 = vmatpush.msra.mxu0 0.0
  %264 = vmatpush.msra.mxu0 0.0
  %265 = vmatpush.msra.mxu0 0.0
  %266 = vmatpush.msra.mxu0 0.0
  %267 = vmatpush.msra.mxu0 0.0
  %268 = vmatpush.msra.mxu0 0.0
  %269 = vmatpush.msra.mxu0 %v102
  %270 = vmatpush.msra.mxu0 %v101
  %271 = vmatpush.msra.mxu0 %v100
  %272 = vmatpush.msra.mxu0 %v99
  %273 = vmatmul.f32.gmra.mxu0 %v255
  %v274 = vpop.f32.mrf.mxu0
  %v275 = vadd.f32 %v91, %v274
  %276 = vdwg.mxu0
  %v277 = vmul.f32 %v250, 0.98
  %v278 = vmul.f32 %v275, 0.02
  %v279 = vadd.f32 %v277, %v278
  %v280 = vsel %vm253, 0.0, %v279
  %v281 = vsel %vm253, 1, 0
  %v282 = vcvt.s32.f32 %v281
  %vm283 = vcmp.gt.f32.partialorder %v280, 1.0
  %v285 = vsel %vm104, %v280, 0
  %287 = vmatpush.msra.mxu0 0.0
  %288 = vmatpush.msra.mxu0 0.0
  %289 = vmatpush.msra.mxu0 0.0
  %290 = vmatpush.msra.mxu0 0.0
  %291 = vmatpush.msra.mxu0 0.0
  %292 = vmatpush.msra.mxu0 0.0
  %293 = vmatpush.msra.mxu0 0.0
  %294 = vmatpush.msra.mxu0 0.0
  %295 = vmatpush.msra.mxu0 0.0
  %296 = vmatpush.msra.mxu0 0.0
  %297 = vmatpush.msra.mxu0 0.0
  %298 = vmatpush.msra.mxu0 0.0
  %299 = vmatpush.msra.mxu0 %v102
  %300 = vmatpush.msra.mxu0 %v101
  %301 = vmatpush.msra.mxu0 %v100
  %302 = vmatpush.msra.mxu0 %v99
  %303 = vmatmul.f32.gmra.mxu0 %v285
  %v304 = vpop.f32.mrf.mxu0
  %v305 = vadd.f32 %v94, %v304
  %306 = vdwg.mxu0
  %v307 = vmul.f32 %v280, 0.98
  %v308 = vmul.f32 %v305, 0.02
  %v309 = vadd.f32 %v307, %v308
  %v310 = vsel %vm283, 0.0, %v309
  %v311 = vsel %vm283, 1, 0
  %v312 = vcvt.s32.f32 %v311
  %vm313 = vcmp.gt.f32.partialorder %v310, 1.0
  %v315 = vsel %vm104, %v310, 0
  %317 = vmatpush.msra.mxu0 0.0
  %318 = vmatpush.msra.mxu0 0.0
  %319 = vmatpush.msra.mxu0 0.0
  %320 = vmatpush.msra.mxu0 0.0
  %321 = vmatpush.msra.mxu0 0.0
  %322 = vmatpush.msra.mxu0 0.0
  %323 = vmatpush.msra.mxu0 0.0
  %324 = vmatpush.msra.mxu0 0.0
  %325 = vmatpush.msra.mxu0 0.0
  %326 = vmatpush.msra.mxu0 0.0
  %327 = vmatpush.msra.mxu0 0.0
  %328 = vmatpush.msra.mxu0 0.0
  %329 = vmatpush.msra.mxu0 %v102
  %330 = vmatpush.msra.mxu0 %v101
  %331 = vmatpush.msra.mxu0 %v100
  %332 = vmatpush.msra.mxu0 %v99
  %333 = vmatmul.f32.gmra.mxu0 %v315
  %v334 = vpop.f32.mrf.mxu0
  %v335 = vadd.f32 %v97, %v334
  %336 = vdwg.mxu0
  %v337 = vmul.f32 %v310, 0.98
  %v338 = vmul.f32 %v335, 0.02
  %v339 = vadd.f32 %v337, %v338
  %v340 = vsel %vm313, 0.0, %v339
  %v341 = vsel %vm313, 1, 0
  %v342 = vcvt.s32.f32 %v341
  %343 = vrot.lane.b32.xlu0 %v160, 32
  %v344 = vpop.permute.xlu0 %343
  %346 = vrot.lane.b32.xlu0 %v190, 64
  %v347 = vpop.permute.xlu0 %346
  %349 = vrot.lane.b32.xlu0 %v220, 96
  %v350 = vpop.permute.xlu0 %349
  %352 = vrot.lane.b32.xlu0 %v280, 32
  %v353 = vpop.permute.xlu0 %352
  %355 = vrot.lane.b32.xlu0 %v310, 64
  %v356 = vpop.permute.xlu0 %355
  %359 = vrot.lane.b32.xlu0 %v340, 96
  %v360 = vpop.permute.xlu0 %359
  %v362 = vsel %vm104, %v130, %v344
  %vm363 = vcmask 523264
  %v364 = vsel %vm363, %v362, %v347
  %vm365 = vcmask 785408
  %v366 = vsel %vm365, %v364, %v350
  %v367 = vsel %vm104, %v250, %v353
  %v368 = vsel %vm363, %v367, %v356
  %v369 = vsel %vm365, %v368, %v360
  %370 = vst [vmem:[%s4] sm:$0xff] %v366
  %371 = vst [vmem:[%s4 + $0x8] sm:$0xff] %v369
  %373 = vrot.lane.b32.xlu0 %v162, 32
  %v374 = vpop.permute.xlu0 %373
  %377 = vrot.lane.b32.xlu0 %v192, 64
  %v378 = vpop.permute.xlu0 %377
  %381 = vrot.lane.b32.xlu0 %v222, 96
  %v382 = vpop.permute.xlu0 %381
  %385 = vrot.lane.b32.xlu0 %v282, 32
  %v386 = vpop.permute.xlu0 %385
  %389 = vrot.lane.b32.xlu0 %v312, 64
  %v390 = vpop.permute.xlu0 %389
  %393 = vrot.lane.b32.xlu0 %v342, 96
  %v394 = vpop.permute.xlu0 %393
  %v396 = vsel %vm104, %v132, %v374
  %v397 = vsel %vm363, %v396, %v378
  %v398 = vsel %vm365, %v397, %v382
  %v399 = vsel %vm104, %v252, %v386
  %v400 = vsel %vm363, %v399, %v390
  %v401 = vsel %vm365, %v400, %v394
  %402 = vst [vmem:[%s5] sm:$0xff] %v398
  %403 = vst [vmem:[%s5 + $0x8] sm:$0xff] %v401
  %v404 = vld [vmem:[%s3] sm:$0xff]
  %v405 = vld [vmem:[%s3 + $0x8] sm:$0xff]
  %v406 = vld [vmem:[%s3 + $0x10] sm:$0xff]
  %v407 = vld [vmem:[%s3 + $0x18] sm:$0xff]
  %v408 = vsel %vm104, %v340, 0
  %v411 = vsel %vm104, %v404, 0
  %v414 = vsel %vm104, %v405, 0
  %v417 = vsel %vm104, %v406, 0
  %v420 = vsel %vm104, %v407, 0
  %422 = vmatpush.xpose.msra.mxu0 0.0
  %423 = vmatpush.xpose.msra.mxu0 0.0
  %424 = vmatpush.xpose.msra.mxu0 0.0
  %425 = vmatpush.xpose.msra.mxu0 0.0
  %426 = vmatpush.xpose.msra.mxu0 0.0
  %427 = vmatpush.xpose.msra.mxu0 0.0
  %428 = vmatpush.xpose.msra.mxu0 0.0
  %429 = vmatpush.xpose.msra.mxu0 0.0
  %430 = vmatpush.xpose.msra.mxu0 0.0
  %431 = vmatpush.xpose.msra.mxu0 0.0
  %432 = vmatpush.xpose.msra.mxu0 0.0
  %433 = vmatpush.xpose.msra.mxu0 0.0
  %434 = vmatpush.xpose.msra.mxu0 %v420
  %435 = vmatpush.xpose.msra.mxu0 %v417
  %436 = vmatpush.xpose.msra.mxu0 %v414
  %437 = vmatpush.xpose.msra.mxu0 %v411
  %438 = vmatmul.f32.gmra.mxu0 %v408
  %v439 = vpop.f32.mrf.mxu0
  %v440 = vadd.f32 0.0, %v439
  %441 = vdwg.mxu0
  %442 = vst.msk [vmem:[%s6] sm:$0xff] %vm104, %v440
  // Predicated region
  $region18: #{_lambda_.1} parent=0 // pred_check
    _
  $region19: #{_lambda_.1} parent=0 // pred_check_branch
    %444 = sbr.rel (0) target = $region21
  $region20: #{_lambda_.1} parent=0 // pred_region
    _
  $region21: #{_lambda_.1} parent=0 // pred_fallthru
    _
  // Predicated region
  $region22: #{_lambda_.1} parent=0 // pred_check
    _
  $region23: #{_lambda_.1} parent=0 // pred_check_branch
    %446 = sbr.rel (0) target = $region25
  $region24: #{_lambda_.1} parent=0 // pred_region
    _
  $region25: #{_lambda_.1} parent=0 // pred_fallthru
    _
  // Predicated region
  $region26: #{_lambda_.1} parent=0 // pred_check
    _
  $region27: #{_lambda_.1} parent=0 // pred_check_branch
    %448 = sbr.rel (0) target = $region29
  $region28: #{_lambda_.1} parent=0 // pred_region
    _
  $region29: #{_lambda_.1} parent=0 // pred_fallthru
    _
  // Predicated region
  $region30: #{_lambda_.1} parent=0 // pred_check
    _
  $region31: #{_lambda_.1} parent=0 // pred_check_branch
    %450 = sbr.rel (0) target = $region33
  $region32: #{_lambda_.1} parent=0 // pred_region
    _
  $region33: #{_lambda_.1} parent=0 // pred_fallthru
    _
  // Predicated region
  $region34: #{_lambda_.1} parent=0 // pred_check
    _
  $region35: #{_lambda_.1} parent=0 // pred_check_branch
    %452 = sbr.rel (0) target = $region37
  $region36: #{_lambda_.1} parent=0 // pred_region
    _
  $region37: #{_lambda_.1} parent=0 // pred_fallthru
    _
  // Predicated region
  $region38: #{_lambda_.1} parent=0 // pred_check
    _
  $region39: #{_lambda_.1} parent=0 // pred_check_branch
    %454 = sbr.rel (0) target = $region41
  $region40: #{_lambda_.1} parent=0 // pred_region
    _
  $region41: #{_lambda_.1} parent=0 // pred_fallthru
    _

</llo_original>
